<compile_context>
chip_gen: v7x
topology: tpu7x:2x2x1
jax: 0.10.0
libtpu: 0.0.40
codegen_flags: <defaults>
</compile_context>

<pallas_src>
import jax
import jax.numpy as jnp
from jax.experimental import pallas as pl
from jax.experimental.pallas import tpu as pltpu


def attn_pool_kernel(x_ref, mask_ref, w_ref, o_ref, m_sc, l_sc, acc_sc):
    j = pl.program_id(1)                              # T-tile index (last axis)

    @pl.when(j == 0)
    def _init():
        m_sc[...] = jnp.full_like(m_sc, -jnp.inf)
        l_sc[...] = jnp.zeros_like(l_sc)
        acc_sc[...] = jnp.zeros_like(acc_sc)

    x = x_ref[...]                                    # (BB, TT, D)
    mask = mask_ref[...]                              # (BB, TT) float32 0/1
    bb, _, d = x.shape

    # Score projection on the MXU: (BB,1,D) x (BB,TT,D) -> (BB,1,TT).
    # (contraction form: no (BB,TT,D) product temporary is materialized)
    w_b = jnp.broadcast_to(w_ref[...][None, :, :], (bb, 1, d))
    s = jnp.einsum('bqd,btd->bqt', w_b, x,
                   preferred_element_type=jnp.float32)[:, 0, :]     # (BB, TT)
    # Linear bias omitted: softmax over T is shift invariant, it cancels.
    s = jnp.where(mask == 0.0, jnp.float32(-1.0e9), s)

    # Online-softmax update (running max / running sum / weighted accumulator).
    m_prev = m_sc[...]                                              # (BB, 1)
    m_new = jnp.maximum(m_prev, jnp.max(s, axis=-1, keepdims=True))
    scale = jnp.exp(m_prev - m_new)                                 # (BB, 1)
    p = jnp.exp(s - m_new)                                          # (BB, TT)
    l_sc[...] = scale * l_sc[...] + jnp.sum(p, axis=-1, keepdims=True)

    # Un-normalized weighted sum over this T tile on the MXU (flash p@v shape).
    pv = jnp.einsum('bqt,btd->bqd', p[:, None, :], x,
                    preferred_element_type=jnp.float32)[:, 0, :]    # (BB, D)
    acc_sc[...] = scale * acc_sc[...] + pv
    m_sc[...] = m_new

    @pl.when(j == pl.num_programs(1) - 1)
    def _finalize():
        inv_l = pl.reciprocal(l_sc[...], approx=False)              # (BB, 1)
        o_ref[...] = (acc_sc[...] * inv_l).astype(o_ref.dtype)


def _round_up(v, m):
    return ((v + m - 1) // m) * m


def _pick_tiles(B, T, D, x_tile_budget_bytes=4 * 1024 * 1024):
    """Pick (batch_block, t_block) under a ~4 MiB-per-buffer VMEM budget."""
    row_bytes = D * 4

    # Batch block: multiple of 8, never past the (rounded-up) real batch, and
    # small enough to leave multiple grid steps when B is large (keeps both
    # v7x TensorCores busy and the DMA pipeline full). Hard cap 512 rows.
    bb = min(_round_up(B, 8), _round_up(pl.cdiv(B, 8), 8), 512)

    if bb * T * row_bytes <= x_tile_budget_bytes:
        tt = T
    else:
        # Shrink the batch block (down to 8) so a full-T tile still fits:
        # keeps the softmax single-pass.
        bb_fit = (x_tile_budget_bytes // (T * row_bytes)) // 8 * 8
        if bb_fit >= 8:
            bb = min(bb, bb_fit)
            tt = T
        else:
            # Long sequence: tile T as well (online softmax). tt must be a
            # multiple of 128 (mask lane dim) that divides T exactly so no
            # garbage tail columns ever enter the softmax.
            bb = 8
            tt = min(max(128, (x_tile_budget_bytes // (bb * row_bytes))
                     // 128 * 128), (T // 128) * 128)
            while tt >= 128 and T % tt:
                tt -= 128
            if tt < 128:
                # TODO(synk): ragged T (no mult-of-128 divisor): falls back to
                # one full-T tile; add in-kernel tail-column masking instead.
                tt = T

    if bb > B:          # only possible when B < 8: use the full batch extent
        bb = B          # (allowed: block dim equals the full array dim)
    return bb, tt


def attn_pool_1d(x, mask, w, b=None, block_b=None, block_t=None):
    """x: (B,T,D) f32, mask: (B,T), w: (D,1), b: (1,) (cancels) -> (B,D)."""
    B, T, D = x.shape
    del b  # Softmax over T is shift invariant; the Linear bias cancels exactly.

    bb_auto, tt_auto = _pick_tiles(B, T, D)
    BB = int(block_b or bb_auto)
    TT = int(block_t or tt_auto)

    mask_f = mask.astype(jnp.float32)
    w_row = w.reshape(1, D).astype(jnp.float32)       # lane-dense weight row

    grid = (pl.cdiv(B, BB), pl.cdiv(T, TT))           # reduction (T) axis last

    out = pl.pallas_call(
        attn_pool_kernel,
        out_shape=jax.ShapeDtypeStruct((B, D), x.dtype),
        grid_spec=pltpu.PrefetchScalarGridSpec(
            num_scalar_prefetch=0,
            grid=grid,
            in_specs=[
                pl.BlockSpec((BB, TT, D), lambda i, j: (i, j, 0)),   # x tile
                pl.BlockSpec((BB, TT), lambda i, j: (i, j)),         # mask tile
                pl.BlockSpec((1, D), lambda i, j: (0, 0)),           # weight
            ],
            out_specs=pl.BlockSpec((BB, D), lambda i, j: (i, 0)),
            scratch_shapes=[
                pltpu.VMEM((BB, 1), jnp.float32),     # running max
                pltpu.VMEM((BB, 1), jnp.float32),     # running sum
                pltpu.VMEM((BB, D), jnp.float32),     # un-normalized pooled sum
            ],
        ),
        compiler_params=pltpu.CompilerParams(
            dimension_semantics=("parallel", "arbitrary"),
            vmem_limit_bytes=32 * 1024 * 1024,
        ),
        cost_estimate=pl.CostEstimate(
            flops=4 * B * T * D,                      # projection + weighted sum
            transcendentals=B * T,                    # exp
            bytes_accessed=4 * (B * T * D + B * T + D + B * D),
        ),
    )(x, mask_f, w_row)

    return out


def attn_pool_1d_ref(x, mask, w, b):
    """Pure-JAX reference mirroring the PyTorch forward."""
    scores = jnp.squeeze(x @ w, -1) + b[0]                   # (B, T)
    scores = jnp.where(mask == 0, -1.0e9, scores)
    alpha = jax.nn.softmax(scores, axis=1)[..., None]        # (B, T, 1)
    return jnp.sum(x * alpha, axis=1)                        # (B, D)


if __name__ == "__main__":
    B, T, D = 2, 8, 32
    key = jax.random.PRNGKey(0)
    kx, km, kw, kb = jax.random.split(key, 4)

    x = jax.random.normal(kx, (B, T, D), dtype=jnp.float32)
    # binary mask with a few zeros (padding positions)
    mask = (jax.random.uniform(km, (B, T)) > 0.25).astype(jnp.float32)

    # deterministic parameter init (nn.Linear(dim, 1): weight (1, D), bias (1,))
    bound = 1.0 / (D ** 0.5)
    w = jax.random.uniform(kw, (D, 1), minval=-bound, maxval=bound,
                           dtype=jnp.float32)
    b = jax.random.uniform(kb, (1,), minval=-bound, maxval=bound,
                           dtype=jnp.float32)

    out = attn_pool_1d(x, mask, w, b)
    out = jax.block_until_ready(out)

    ref = attn_pool_1d_ref(x, mask, w, b)
    assert out.shape == (B, D)
    assert jnp.allclose(out, ref, atol=1e-5, rtol=1e-5), \
        float(jnp.max(jnp.abs(out - ref)))

    print("KERNEL_OK")
</pallas_src>

<mosaic_0001>
module attributes {stable_mosaic.version = 11 : i64} {
  func.func @attn_pool_kernel(%arg0: i32, %arg1: i32, %arg2: memref<2x8x32xf32, #tpu.memory_space<vmem>>, %arg3: memref<2x8xf32, #tpu.memory_space<vmem>>, %arg4: memref<1x32xf32, #tpu.memory_space<vmem>>, %arg5: memref<2x32xf32, #tpu.memory_space<vmem>>, %arg6: memref<2x1xf32, #tpu.memory_space<vmem>>, %arg7: memref<2x1xf32, #tpu.memory_space<vmem>>, %arg8: memref<2x32xf32, #tpu.memory_space<vmem>>) attributes {dimension_semantics = [#tpu.dimension_semantics<parallel>, #tpu.dimension_semantics<arbitrary>], iteration_bounds = array<i64: 1, 1>, scalar_prefetch = 0 : i64, scratch_operands = 3 : i64, tpu.core_type = #tpu.core_type<tc>, window_params = [{transform_indices = @transform_0, window_bounds = array<i64: 2, 8, 32>}, {transform_indices = @transform_1, window_bounds = array<i64: 2, 8>}, {pipeline_mode = #tpu.pipeline_mode<synchronous>, transform_indices = @transform_2, window_bounds = array<i64: 1, 32>}, {transform_indices = @transform_3, window_bounds = array<i64: 2, 32>}]} {
    %c0_i32 = arith.constant 0 : i32
    %0 = arith.cmpi eq, %arg1, %c0_i32 : i32
    %1 = arith.extui %0 : i1 to i32
    %c0_i32_0 = arith.constant 0 : i32
    %2 = arith.cmpi ne, %1, %c0_i32_0 : i32
    scf.if %2 {
      %cst_26 = arith.constant 0xFF800000 : f32
      %42 = vector.broadcast %cst_26 : f32 to vector<2x1xf32>
      %c0_27 = arith.constant 0 : index
      %c0_28 = arith.constant 0 : index
      %43 = vector.load %arg6[%c0_27, %c0_28] : memref<2x1xf32, #tpu.memory_space<vmem>>, vector<2x1xf32>
      tpu.vector_store %arg6[%c0_27, %c0_28], %42 {strides = array<i32>} : memref<2x1xf32, #tpu.memory_space<vmem>>, vector<2x1xf32>,
      %cst_29 = arith.constant 0.000000e+00 : f32
      %44 = vector.broadcast %cst_29 : f32 to vector<2x1xf32>
      %c0_30 = arith.constant 0 : index
      %c0_31 = arith.constant 0 : index
      %45 = vector.load %arg7[%c0_30, %c0_31] : memref<2x1xf32, #tpu.memory_space<vmem>>, vector<2x1xf32>
      tpu.vector_store %arg7[%c0_30, %c0_31], %44 {strides = array<i32>} : memref<2x1xf32, #tpu.memory_space<vmem>>, vector<2x1xf32>,
      %cst_32 = arith.constant 0.000000e+00 : f32
      %46 = vector.broadcast %cst_32 : f32 to vector<2x32xf32>
      %c0_33 = arith.constant 0 : index
      %c0_34 = arith.constant 0 : index
      %47 = vector.load %arg8[%c0_33, %c0_34] : memref<2x32xf32, #tpu.memory_space<vmem>>, vector<2x32xf32>
      tpu.vector_store %arg8[%c0_33, %c0_34], %46 {strides = array<i32>} : memref<2x32xf32, #tpu.memory_space<vmem>>, vector<2x32xf32>,
    } else {
    }
    %c0 = arith.constant 0 : index
    %c0_1 = arith.constant 0 : index
    %c0_2 = arith.constant 0 : index
    %3 = vector.load %arg2[%c0, %c0_1, %c0_2] : memref<2x8x32xf32, #tpu.memory_space<vmem>>, vector<2x8x32xf32>
    %c0_3 = arith.constant 0 : index
    %c0_4 = arith.constant 0 : index
    %4 = vector.load %arg3[%c0_3, %c0_4] : memref<2x8xf32, #tpu.memory_space<vmem>>, vector<2x8xf32>
    %c0_5 = arith.constant 0 : index
    %c0_6 = arith.constant 0 : index
    %5 = vector.load %arg4[%c0_5, %c0_6] : memref<1x32xf32, #tpu.memory_space<vmem>>, vector<1x32xf32>
    %6 = vector.shape_cast %5 : vector<1x32xf32> to vector<1x1x32xf32>
    %7 = vector.shape_cast %6 : vector<1x1x32xf32> to vector<1x1x32xf32>
    %8 = vector.broadcast %7 : vector<1x1x32xf32> to vector<2x1x32xf32>
    "tpu.trace_start"() <{level = 10 : i32, message = "bqd,btd->bqt"}> : () -> ()
    %cst = arith.constant dense<0.000000e+00> : vector<2x1x8xf32>
    %9 = tpu.matmul %8, %3, %cst {dimension_numbers = #tpu.dot_dimension_numbers<[2], [2], [1], [1], [0, 0, 0, 1, 1, 1], [0], [0]>} : vector<2x1x32xf32>, vector<2x8x32xf32>, vector<2x1x8xf32> -> vector<2x1x8xf32>
    "tpu.trace_stop"() : () -> ()
    %10 = vector.shape_cast %9 : vector<2x1x8xf32> to vector<2x8xf32>
    %cst_7 = arith.constant 0.000000e+00 : f32
    %11 = vector.broadcast %cst_7 : f32 to vector<2x8xf32>
    %12 = arith.cmpf oeq, %4, %11 : vector<2x8xf32>
    %cst_8 = arith.constant -1.000000e+09 : f32
    %13 = vector.broadcast %cst_8 : f32 to vector<2x8xf32>
    %14 = arith.select %12, %13, %10 : vector<2x8xi1>, vector<2x8xf32>
    %c0_9 = arith.constant 0 : index
    %c0_10 = arith.constant 0 : index
    %15 = vector.load %arg6[%c0_9, %c0_10] : memref<2x1xf32, #tpu.memory_space<vmem>>, vector<2x1xf32>
    %cst_11 = arith.constant dense<0xFF800000> : vector<2xf32>
    %16 = vector.multi_reduction <maximumf>, %14, %cst_11 [1] : vector<2x8xf32> to vector<2xf32>
    %17 = vector.shape_cast %16 : vector<2xf32> to vector<2x1xf32>
    %18 = arith.maximumf %15, %17 : vector<2x1xf32>
    %19 = arith.subf %15, %18 : vector<2x1xf32>
    %20 = math.exp %19 : vector<2x1xf32>
    %21 = vector.broadcast %18 : vector<2x1xf32> to vector<2x8xf32>
    %22 = arith.subf %14, %21 : vector<2x8xf32>
    %23 = math.exp %22 : vector<2x8xf32>
    %c0_12 = arith.constant 0 : index
    %c0_13 = arith.constant 0 : index
    %24 = vector.load %arg7[%c0_12, %c0_13] : memref<2x1xf32, #tpu.memory_space<vmem>>, vector<2x1xf32>
    %25 = arith.mulf %20, %24 : vector<2x1xf32>
    %cst_14 = arith.constant dense<0.000000e+00> : vector<2xf32>
    %26 = vector.multi_reduction <add>, %23, %cst_14 [1] : vector<2x8xf32> to vector<2xf32>
    %27 = vector.shape_cast %26 : vector<2xf32> to vector<2x1xf32>
    %28 = arith.addf %25, %27 : vector<2x1xf32>
    %c0_15 = arith.constant 0 : index
    %c0_16 = arith.constant 0 : index
    %29 = vector.load %arg7[%c0_15, %c0_16] : memref<2x1xf32, #tpu.memory_space<vmem>>, vector<2x1xf32>
    tpu.vector_store %arg7[%c0_15, %c0_16], %28 {strides = array<i32>} : memref<2x1xf32, #tpu.memory_space<vmem>>, vector<2x1xf32>,
    %30 = vector.shape_cast %23 : vector<2x8xf32> to vector<2x1x8xf32>
    "tpu.trace_start"() <{level = 10 : i32, message = "bqt,btd->bqd"}> : () -> ()
    %cst_17 = arith.constant dense<0.000000e+00> : vector<2x1x32xf32>
    %31 = tpu.matmul %30, %3, %cst_17 {dimension_numbers = #tpu.dot_dimension_numbers<[2], [1], [1], [2], [0, 0, 0, 1, 1, 2], [0], [0]>} : vector<2x1x8xf32>, vector<2x8x32xf32>, vector<2x1x32xf32> -> vector<2x1x32xf32>
    "tpu.trace_stop"() : () -> ()
    %32 = vector.shape_cast %31 : vector<2x1x32xf32> to vector<2x32xf32>
    %c0_18 = arith.constant 0 : index
    %c0_19 = arith.constant 0 : index
    %33 = vector.load %arg8[%c0_18, %c0_19] : memref<2x32xf32, #tpu.memory_space<vmem>>, vector<2x32xf32>
    %34 = vector.broadcast %20 : vector<2x1xf32> to vector<2x32xf32>
    %35 = arith.mulf %34, %33 : vector<2x32xf32>
    %36 = arith.addf %35, %32 : vector<2x32xf32>
    %c0_20 = arith.constant 0 : index
    %c0_21 = arith.constant 0 : index
    %37 = vector.load %arg8[%c0_20, %c0_21] : memref<2x32xf32, #tpu.memory_space<vmem>>, vector<2x32xf32>
    tpu.vector_store %arg8[%c0_20, %c0_21], %36 {strides = array<i32>} : memref<2x32xf32, #tpu.memory_space<vmem>>, vector<2x32xf32>,
    %c0_22 = arith.constant 0 : index
    %c0_23 = arith.constant 0 : index
    %38 = vector.load %arg6[%c0_22, %c0_23] : memref<2x1xf32, #tpu.memory_space<vmem>>, vector<2x1xf32>
    tpu.vector_store %arg6[%c0_22, %c0_23], %18 {strides = array<i32>} : memref<2x1xf32, #tpu.memory_space<vmem>>, vector<2x1xf32>,
    %c0_i32_24 = arith.constant 0 : i32
    %39 = arith.cmpi eq, %arg1, %c0_i32_24 : i32
    %40 = arith.extui %39 : i1 to i32
    %c0_i32_25 = arith.constant 0 : i32
    %41 = arith.cmpi ne, %40, %c0_i32_25 : i32
    scf.if %41 {
      %c0_26 = arith.constant 0 : index
      %c0_27 = arith.constant 0 : index
      %42 = vector.load %arg7[%c0_26, %c0_27] : memref<2x1xf32, #tpu.memory_space<vmem>>, vector<2x1xf32>
      %43 = tpu.reciprocal %42 : vector<2x1xf32> -> vector<2x1xf32>
      %c0_28 = arith.constant 0 : index
      %c0_29 = arith.constant 0 : index
      %44 = vector.load %arg8[%c0_28, %c0_29] : memref<2x32xf32, #tpu.memory_space<vmem>>, vector<2x32xf32>
      %45 = vector.broadcast %43 : vector<2x1xf32> to vector<2x32xf32>
      %46 = arith.mulf %44, %45 : vector<2x32xf32>
      %c0_30 = arith.constant 0 : index
      %c0_31 = arith.constant 0 : index
      %47 = vector.load %arg5[%c0_30, %c0_31] : memref<2x32xf32, #tpu.memory_space<vmem>>, vector<2x32xf32>
      tpu.vector_store %arg5[%c0_30, %c0_31], %46 {strides = array<i32>} : memref<2x32xf32, #tpu.memory_space<vmem>>, vector<2x32xf32>,
    } else {
    }
    return
  }
  func.func @transform_0(%arg0: i32, %arg1: i32) -> (i32, i32, i32) {
    %c0_i32 = arith.constant 0 : i32
    %c0_i32_0 = arith.constant 0 : i32
    return %arg0, %arg1, %c0_i32 : i32, i32, i32
  }
  func.func @transform_1(%arg0: i32, %arg1: i32) -> (i32, i32) {
    %c0_i32 = arith.constant 0 : i32
    return %arg0, %arg1 : i32, i32
  }
  func.func @transform_2(%arg0: i32, %arg1: i32) -> (i32, i32) {
    %c0_i32 = arith.constant 0 : i32
    %c0_i32_0 = arith.constant 0 : i32
    %c0_i32_1 = arith.constant 0 : i32
    return %c0_i32, %c0_i32_0 : i32, i32
  }
  func.func @transform_3(%arg0: i32, %arg1: i32) -> (i32, i32) {
    %c0_i32 = arith.constant 0 : i32
    %c0_i32_0 = arith.constant 0 : i32
    return %arg0, %c0_i32 : i32, i32
  }
}

</mosaic_0001>

<llo_original>
// kernel: tpu_custom_call.1
$region0: #{tpu_custom_call.1}
  #allocation0 [shape = 'u32[]', space=smem, size = 0x4, offset = 0x4, fixed_abs, tag = 'smem constant byte address 0x4 - core index']
  #allocation1 [shape = 'u32[144,128]{1,0:T(1,128)}', space=vmem, size = 0x12000, scoped, tag = 'internal scratch']
  #allocation2 [shape = 'f32[2,1]{1,0:T(2,128)}', space=vmem, size = 0x400, scoped, tag = 'scratch operand']
  #allocation3 [shape = 'f32[2,1]{1,0:T(2,128)}', space=vmem, size = 0x400, scoped, tag = 'scratch operand']
  #allocation4 [shape = 'f32[2,32]{1,0:T(2,128)}', space=vmem, size = 0x400, scoped, tag = 'scratch operand']
  %s0 = inlined_call_operand.hbm [shape: f32[2,8,32], index: 0, kind: input, shape index: {}]
  %s1 = inlined_call_operand.vmem [shape: f32[2,8], index: 1, kind: input, shape index: {}]
  %s2 = inlined_call_operand.vmem [shape: f32[1,32], index: 2, kind: input, shape index: {}]
  %s3 = inlined_call_operand.hbm [shape: f32[2,32], index: 3, kind: output, shape index: {}]
  %s4 = sld [smem:[#allocation0]]
  $region34: #{tpu_custom_call.1} parent=0
    _
  %s6 = ssub.s32 1, %s4
  %s7 = scalar_select 0, %s6, %s4
  $region1: #{tpu_custom_call.1} parent=0
    #allocation5 [shape = 'u8[8192]{0}', space=vmem, size = 0x2000, scoped, tag = 'input window, operand 0, single buffered']
    #allocation6 [shape = 's32[1]{0}', space=sflag, size = 0x4, scoped, tag = 'scoped memory for tpu_custom_call.1']
    #allocation7 [shape = 's32[1]{0}', space=sflag, size = 0x4, scoped, tag = 'scoped memory for tpu_custom_call.1']
    #allocation8 [shape = 'u8[1024]{0}', space=vmem, size = 0x400, scoped, tag = 'output window, operand 0, single buffered']
    %8 = vsyncpa [#allocation6], 0
    %9 = vsyncpa [#allocation7], 0
    // Predicated region
    $region2: #{tpu_custom_call.1} parent=1 // pred_check
      _
    $region3: #{tpu_custom_call.1} parent=1 // pred_check_branch
      %11 = sbr.rel (0) target = $region5
    $region4: #{tpu_custom_call.1} parent=1 // pred_region
      %s13 = ssub.s32 256, 256
      %14 = vsyncadd [#allocation6], %s13
      %s15 = sshll.u32 [#allocation5], 4
      %s16 = int_to_ptr.vmem [resolvable:$true] %s15
      %21 = dma.hbm_to_vmem [thread:$0]  %s0, 256, %s16, [#allocation6], 128, 128, 8
    $region5: #{tpu_custom_call.1} parent=1 // pred_fallthru
      _
    // Predicated region
    $region6: #{tpu_custom_call.1} parent=1 // pred_check
      _
    $region7: #{tpu_custom_call.1} parent=1 // pred_check_branch
      %23 = sbr.rel (0) target = $region9
    $region8: #{tpu_custom_call.1} parent=1 // pred_region
      _
    $region9: #{tpu_custom_call.1} parent=1 // pred_fallthru
      _
    // Predicated region
    $region10: #{tpu_custom_call.1} parent=1 // pred_check
      _
    $region11: #{tpu_custom_call.1} parent=1 // pred_check_branch
      %25 = sbr.rel (0) target = $region13
    $region12: #{tpu_custom_call.1} parent=1 // pred_region
      _
    $region13: #{tpu_custom_call.1} parent=1 // pred_fallthru
      _
    // Predicated region
    $region14: #{tpu_custom_call.1} parent=1 // pred_check
      _
    $region15: #{tpu_custom_call.1} parent=1 // pred_check_branch
      %27 = sbr.rel (0) target = $region17
    $region16: #{tpu_custom_call.1} parent=1 // pred_region
      %28 = dma.done [#allocation6], 256
    $region17: #{tpu_custom_call.1} parent=1 // pred_fallthru
      _
    %p29 = scmp.eq.s32.totalorder 0, 0
    // Predicated region
    $region18: #{tpu_custom_call.1} parent=1 // pred_check
      %p30 = pneg %p29
    $region19: #{tpu_custom_call.1} parent=1 // pred_check_branch
      %32 = sbr.rel (%p30) target = $region21
    $region20: #{tpu_custom_call.1} parent=1 // pred_region
      %vm33 = vcmask 1024
      %34 = vst.msk [vmem:[#allocation2] sm:$0x3] %vm33, -inf
      %35 = vst.msk [vmem:[#allocation3] sm:$0x3] %vm33, 0.0
      %vm36 = vcmask 254976
      %37 = vst.msk [vmem:[#allocation4] sm:$0x3] %vm36, 0.0
    $region21: #{tpu_custom_call.1} parent=1 // pred_fallthru
      _
    %v38 = vld [vmem:[#allocation5] sm:$0xff]
    %v39 = vld [vmem:[#allocation5 + $0x8] sm:$0xff]
    %v40 = vld [vmem:[%s1] sm:$0x3]
    %v41 = vld [vmem:[%s2] sm:$0x1]
    %vm42 = vcmask 261120
    %v44 = vsel %vm42, %v41, 0
    %v47 = vsel %vm42, %v38, 0
    %49 = vmatprep.subr.mxu0 0.0
    %50 = vmatpush1.xpose.msra.mxu0 %v47
    %51 = vmatprep.subr.mxu0 0.0
    %52 = vmatpush1.xpose.msra.mxu0 0.0
    %53 = vmatprep.subr.mxu0 0.0
    %54 = vmatpush1.xpose.msra.mxu0 0.0
    %55 = vmatprep.subr.mxu0 0.0
    %56 = vmatpush1.xpose.msra.mxu0 0.0
    %57 = vmatprep.subr.mxu0 0.0
    %58 = vmatpush1.xpose.msra.mxu0 0.0
    %59 = vmatprep.subr.mxu0 0.0
    %60 = vmatpush1.xpose.msra.mxu0 0.0
    %61 = vmatprep.subr.mxu0 0.0
    %62 = vmatpush1.xpose.msra.mxu0 0.0
    %63 = vmatprep.subr.mxu0 0.0
    %64 = vmatpush1.xpose.msra.mxu0 0.0
    %65 = vmatprep.subr.mxu0 0.0
    %66 = vmatpush1.xpose.msra.mxu0 0.0
    %67 = vmatprep.subr.mxu0 0.0
    %68 = vmatpush1.xpose.msra.mxu0 0.0
    %69 = vmatprep.subr.mxu0 0.0
    %70 = vmatpush1.xpose.msra.mxu0 0.0
    %71 = vmatprep.subr.mxu0 0.0
    %72 = vmatpush1.xpose.msra.mxu0 0.0
    %73 = vmatprep.subr.mxu0 0.0
    %74 = vmatpush1.xpose.msra.mxu0 0.0
    %75 = vmatprep.subr.mxu0 0.0
    %76 = vmatpush1.xpose.msra.mxu0 0.0
    %77 = vmatprep.subr.mxu0 0.0
    %78 = vmatpush1.xpose.msra.mxu0 0.0
    %79 = vmatprep.subr.mxu0 0.0
    %80 = vmatpush1.xpose.msra.mxu0 0.0
    %81 = vmatprep.subr.mxu0 0.0
    %82 = vmatpush1.xpose.msra.mxu0 0.0
    %83 = vmatprep.subr.mxu0 0.0
    %84 = vmatpush1.xpose.msra.mxu0 0.0
    %85 = vmatprep.subr.mxu0 0.0
    %86 = vmatpush1.xpose.msra.mxu0 0.0
    %87 = vmatprep.subr.mxu0 0.0
    %88 = vmatpush1.xpose.msra.mxu0 0.0
    %89 = vmatprep.subr.mxu0 0.0
    %90 = vmatpush1.xpose.msra.mxu0 0.0
    %91 = vmatprep.subr.mxu0 0.0
    %92 = vmatpush1.xpose.msra.mxu0 0.0
    %93 = vmatprep.subr.mxu0 0.0
    %94 = vmatpush1.xpose.msra.mxu0 0.0
    %95 = vmatprep.subr.mxu0 0.0
    %96 = vmatpush1.xpose.msra.mxu0 0.0
    %97 = vmatprep.subr.mxu0 0.0
    %98 = vmatpush1.xpose.msra.mxu0 0.0
    %99 = vmatprep.subr.mxu0 0.0
    %100 = vmatpush1.xpose.msra.mxu0 0.0
    %101 = vmatprep.subr.mxu0 0.0
    %102 = vmatpush1.xpose.msra.mxu0 0.0
    %103 = vmatprep.subr.mxu0 0.0
    %104 = vmatpush1.xpose.msra.mxu0 0.0
    %105 = vmatprep.subr.mxu0 0.0
    %106 = vmatpush1.xpose.msra.mxu0 0.0
    %107 = vmatprep.subr.mxu0 0.0
    %108 = vmatpush1.xpose.msra.mxu0 0.0
    %109 = vmatprep.subr.mxu0 0.0
    %110 = vmatpush1.xpose.msra.mxu0 0.0
    %111 = vmatprep.subr.mxu0 0.0
    %112 = vmatpush1.xpose.msra.mxu0 0.0
    %113 = vmatprep.mubr.f32.mxu0 0.0
    %114 = vmatmul.mubr.f32.gmra.mrb[0].mxu0 %v44
    %v115 = vpop.f32.mrb[0].mxu0
    %v116 = vadd.f32 0.0, %v115
    %v117 = vpop.f32.mrb[0].mxu0
    %118 = vdwg.mxu0
    %v120 = vsel %vm42, %v39, 0
    %122 = vmatprep.subr.mxu0 0.0
    %123 = vmatpush1.xpose.msra.mxu0 %v120
    %124 = vmatprep.subr.mxu0 0.0
    %125 = vmatpush1.xpose.msra.mxu0 0.0
    %126 = vmatprep.subr.mxu0 0.0
    %127 = vmatpush1.xpose.msra.mxu0 0.0
    %128 = vmatprep.subr.mxu0 0.0
    %129 = vmatpush1.xpose.msra.mxu0 0.0
    %130 = vmatprep.subr.mxu0 0.0
    %131 = vmatpush1.xpose.msra.mxu0 0.0
    %132 = vmatprep.subr.mxu0 0.0
    %133 = vmatpush1.xpose.msra.mxu0 0.0
    %134 = vmatprep.subr.mxu0 0.0
    %135 = vmatpush1.xpose.msra.mxu0 0.0
    %136 = vmatprep.subr.mxu0 0.0
    %137 = vmatpush1.xpose.msra.mxu0 0.0
    %138 = vmatprep.subr.mxu0 0.0
    %139 = vmatpush1.xpose.msra.mxu0 0.0
    %140 = vmatprep.subr.mxu0 0.0
    %141 = vmatpush1.xpose.msra.mxu0 0.0
    %142 = vmatprep.subr.mxu0 0.0
    %143 = vmatpush1.xpose.msra.mxu0 0.0
    %144 = vmatprep.subr.mxu0 0.0
    %145 = vmatpush1.xpose.msra.mxu0 0.0
    %146 = vmatprep.subr.mxu0 0.0
    %147 = vmatpush1.xpose.msra.mxu0 0.0
    %148 = vmatprep.subr.mxu0 0.0
    %149 = vmatpush1.xpose.msra.mxu0 0.0
    %150 = vmatprep.subr.mxu0 0.0
    %151 = vmatpush1.xpose.msra.mxu0 0.0
    %152 = vmatprep.subr.mxu0 0.0
    %153 = vmatpush1.xpose.msra.mxu0 0.0
    %154 = vmatprep.subr.mxu0 0.0
    %155 = vmatpush1.xpose.msra.mxu0 0.0
    %156 = vmatprep.subr.mxu0 0.0
    %157 = vmatpush1.xpose.msra.mxu0 0.0
    %158 = vmatprep.subr.mxu0 0.0
    %159 = vmatpush1.xpose.msra.mxu0 0.0
    %160 = vmatprep.subr.mxu0 0.0
    %161 = vmatpush1.xpose.msra.mxu0 0.0
    %162 = vmatprep.subr.mxu0 0.0
    %163 = vmatpush1.xpose.msra.mxu0 0.0
    %164 = vmatprep.subr.mxu0 0.0
    %165 = vmatpush1.xpose.msra.mxu0 0.0
    %166 = vmatprep.subr.mxu0 0.0
    %167 = vmatpush1.xpose.msra.mxu0 0.0
    %168 = vmatprep.subr.mxu0 0.0
    %169 = vmatpush1.xpose.msra.mxu0 0.0
    %170 = vmatprep.subr.mxu0 0.0
    %171 = vmatpush1.xpose.msra.mxu0 0.0
    %172 = vmatprep.subr.mxu0 0.0
    %173 = vmatpush1.xpose.msra.mxu0 0.0
    %174 = vmatprep.subr.mxu0 0.0
    %175 = vmatpush1.xpose.msra.mxu0 0.0
    %176 = vmatprep.subr.mxu0 0.0
    %177 = vmatpush1.xpose.msra.mxu0 0.0
    %178 = vmatprep.subr.mxu0 0.0
    %179 = vmatpush1.xpose.msra.mxu0 0.0
    %180 = vmatprep.subr.mxu0 0.0
    %181 = vmatpush1.xpose.msra.mxu0 0.0
    %182 = vmatprep.subr.mxu0 0.0
    %183 = vmatpush1.xpose.msra.mxu0 0.0
    %184 = vmatprep.subr.mxu0 0.0
    %185 = vmatpush1.xpose.msra.mxu0 0.0
    %186 = vmatprep.mubr.f32.mxu0 0.0
    %187 = vmatmul.mubr.f32.gmra.mrb[0].mxu0 %v44
    %v188 = vpop.f32.mrb[0].mxu0
    %v189 = vadd.f32 0.0, %v188
    %v190 = vpop.f32.mrb[0].mxu0
    %191 = vdwg.mxu0
    %vm192 = vcmp.eq.f32.partialorder %v40, 0.0
    %v195 = vrot.slane %v189, 7
    %vm196 = vcmask 1041409
    %v197 = vsel %vm196, %v195, %v116
    %v199 = vsel %vm192, -1e+09, %v197
    %v200 = vld [vmem:[#allocation2] sm:$0x3]
    %vm201 = vcmask 58368
    %v202 = vsel %vm201, %v199, -inf
    %203 = vmax.xlane.f32.xlu0 %v202
    %v204 = vpop.xlane.xlu0 %203
    %v205 = vmax.f32 %v200, %v204
    %v206 = vsub.f32 %v200, %v205
    %v207 = vmul.f32 %v206, 1.442695
    %v208 = vpow.pop %v207
    %210 = vset.pattern.permute.xlu0 0
    %211 = vperm.xlu0 %210, %v205
    %v212 = vpop.permute.xlu0 %211
    %v214 = vsub.f32 %v199, %v212
    %v215 = vmul.f32 %v214, 1.442695
    %v216 = vpow.pop %v215
    %v217 = vld [vmem:[#allocation3] sm:$0x3]
    %v218 = vmul.f32 %v208, %v217
    %v219 = vsel %vm201, %v216, 0.0
    %220 = vadd.xlane.f32.xlu0 %v219
    %v221 = vpop.xlane.xlu0 %220
    %v222 = vadd.f32 %v218, %v221
    %vm223 = vcmask 1024
    %224 = vst.msk [vmem:[#allocation3] sm:$0x3] %vm223, %v222
    %v227 = vunpack.c.l.s4 1966171168
    %v228 = vunpack.c.0.s8 %v227
    %v229 = vlaneseq
    %v230 = vshrl.u32 %v229, 7
    %v231 = vsub.s32 %v228, %v230
    %v232 = vrot.slane %v216, %v231
    %v233 = vcombine.high %v232, %v232
    %v235 = vunpack.c.l.s4 1966171168
    %v236 = vunpack.c.0.s8 %v235
    %v237 = vlaneseq
    %v238 = vshrl.u32 %v237, 7
    %v239 = vsub.s32 %v236, %v238
    %v240 = vrot.slane %v232, %v239
    %v242 = vunpack.c.l.s4 1966171168
    %v243 = vunpack.c.0.s8 %v242
    %v244 = vlaneseq
    %v245 = vshrl.u32 %v244, 7
    %v246 = vsub.s32 %v243, %v245
    %v247 = vrot.slane %v233, %v246
    %vm248 = vcmask 64512
    %v249 = vsel %vm248, %v240, 0
    %251 = vmatprep.subr.mxu0 0.0
    %252 = vmatpush1.msra.mxu0 %v38
    %253 = vmatprep.subr.mxu0 0.0
    %254 = vmatpush1.msra.mxu0 0.0
    %255 = vmatprep.subr.mxu0 0.0
    %256 = vmatpush1.msra.mxu0 0.0
    %257 = vmatprep.subr.mxu0 0.0
    %258 = vmatpush1.msra.mxu0 0.0
    %259 = vmatprep.subr.mxu0 0.0
    %260 = vmatpush1.msra.mxu0 0.0
    %261 = vmatprep.subr.mxu0 0.0
    %262 = vmatpush1.msra.mxu0 0.0
    %263 = vmatprep.subr.mxu0 0.0
    %264 = vmatpush1.msra.mxu0 0.0
    %265 = vmatprep.subr.mxu0 0.0
    %266 = vmatpush1.msra.mxu0 0.0
    %267 = vmatprep.subr.mxu0 0.0
    %268 = vmatpush1.msra.mxu0 0.0
    %269 = vmatprep.subr.mxu0 0.0
    %270 = vmatpush1.msra.mxu0 0.0
    %271 = vmatprep.subr.mxu0 0.0
    %272 = vmatpush1.msra.mxu0 0.0
    %273 = vmatprep.subr.mxu0 0.0
    %274 = vmatpush1.msra.mxu0 0.0
    %275 = vmatprep.subr.mxu0 0.0
    %276 = vmatpush1.msra.mxu0 0.0
    %277 = vmatprep.subr.mxu0 0.0
    %278 = vmatpush1.msra.mxu0 0.0
    %279 = vmatprep.subr.mxu0 0.0
    %280 = vmatpush1.msra.mxu0 0.0
    %281 = vmatprep.subr.mxu0 0.0
    %282 = vmatpush1.msra.mxu0 0.0
    %283 = vmatprep.subr.mxu0 0.0
    %284 = vmatpush1.msra.mxu0 0.0
    %285 = vmatprep.subr.mxu0 0.0
    %286 = vmatpush1.msra.mxu0 0.0
    %287 = vmatprep.subr.mxu0 0.0
    %288 = vmatpush1.msra.mxu0 0.0
    %289 = vmatprep.subr.mxu0 0.0
    %290 = vmatpush1.msra.mxu0 0.0
    %291 = vmatprep.subr.mxu0 0.0
    %292 = vmatpush1.msra.mxu0 0.0
    %293 = vmatprep.subr.mxu0 0.0
    %294 = vmatpush1.msra.mxu0 0.0
    %295 = vmatprep.subr.mxu0 0.0
    %296 = vmatpush1.msra.mxu0 0.0
    %297 = vmatprep.subr.mxu0 0.0
    %298 = vmatpush1.msra.mxu0 0.0
    %299 = vmatprep.subr.mxu0 0.0
    %300 = vmatpush1.msra.mxu0 0.0
    %301 = vmatprep.subr.mxu0 0.0
    %302 = vmatpush1.msra.mxu0 0.0
    %303 = vmatprep.subr.mxu0 0.0
    %304 = vmatpush1.msra.mxu0 0.0
    %305 = vmatprep.subr.mxu0 0.0
    %306 = vmatpush1.msra.mxu0 0.0
    %307 = vmatprep.subr.mxu0 0.0
    %308 = vmatpush1.msra.mxu0 0.0
    %309 = vmatprep.subr.mxu0 0.0
    %310 = vmatpush1.msra.mxu0 0.0
    %311 = vmatprep.subr.mxu0 0.0
    %312 = vmatpush1.msra.mxu0 0.0
    %313 = vmatprep.subr.mxu0 0.0
    %314 = vmatpush1.msra.mxu0 0.0
    %315 = vmatprep.mubr.f32.mxu0 0.0
    %316 = vmatmul.mubr.f32.gmra.mrb[0].mxu0 %v249
    %v317 = vpop.f32.mrb[0].mxu0
    %v318 = vadd.f32 0.0, %v317
    %v319 = vpop.f32.mrb[0].mxu0
    %320 = vdwg.mxu0
    %v321 = vsel %vm248, %v247, 0
    %323 = vmatprep.subr.mxu0 0.0
    %324 = vmatpush1.msra.mxu0 %v39
    %325 = vmatprep.subr.mxu0 0.0
    %326 = vmatpush1.msra.mxu0 0.0
    %327 = vmatprep.subr.mxu0 0.0
    %328 = vmatpush1.msra.mxu0 0.0
    %329 = vmatprep.subr.mxu0 0.0
    %330 = vmatpush1.msra.mxu0 0.0
    %331 = vmatprep.subr.mxu0 0.0
    %332 = vmatpush1.msra.mxu0 0.0
    %333 = vmatprep.subr.mxu0 0.0
    %334 = vmatpush1.msra.mxu0 0.0
    %335 = vmatprep.subr.mxu0 0.0
    %336 = vmatpush1.msra.mxu0 0.0
    %337 = vmatprep.subr.mxu0 0.0
    %338 = vmatpush1.msra.mxu0 0.0
    %339 = vmatprep.subr.mxu0 0.0
    %340 = vmatpush1.msra.mxu0 0.0
    %341 = vmatprep.subr.mxu0 0.0
    %342 = vmatpush1.msra.mxu0 0.0
    %343 = vmatprep.subr.mxu0 0.0
    %344 = vmatpush1.msra.mxu0 0.0
    %345 = vmatprep.subr.mxu0 0.0
    %346 = vmatpush1.msra.mxu0 0.0
    %347 = vmatprep.subr.mxu0 0.0
    %348 = vmatpush1.msra.mxu0 0.0
    %349 = vmatprep.subr.mxu0 0.0
    %350 = vmatpush1.msra.mxu0 0.0
    %351 = vmatprep.subr.mxu0 0.0
    %352 = vmatpush1.msra.mxu0 0.0
    %353 = vmatprep.subr.mxu0 0.0
    %354 = vmatpush1.msra.mxu0 0.0
    %355 = vmatprep.subr.mxu0 0.0
    %356 = vmatpush1.msra.mxu0 0.0
    %357 = vmatprep.subr.mxu0 0.0
    %358 = vmatpush1.msra.mxu0 0.0
    %359 = vmatprep.subr.mxu0 0.0
    %360 = vmatpush1.msra.mxu0 0.0
    %361 = vmatprep.subr.mxu0 0.0
    %362 = vmatpush1.msra.mxu0 0.0
    %363 = vmatprep.subr.mxu0 0.0
    %364 = vmatpush1.msra.mxu0 0.0
    %365 = vmatprep.subr.mxu0 0.0
    %366 = vmatpush1.msra.mxu0 0.0
    %367 = vmatprep.subr.mxu0 0.0
    %368 = vmatpush1.msra.mxu0 0.0
    %369 = vmatprep.subr.mxu0 0.0
    %370 = vmatpush1.msra.mxu0 0.0
    %371 = vmatprep.subr.mxu0 0.0
    %372 = vmatpush1.msra.mxu0 0.0
    %373 = vmatprep.subr.mxu0 0.0
    %374 = vmatpush1.msra.mxu0 0.0
    %375 = vmatprep.subr.mxu0 0.0
    %376 = vmatpush1.msra.mxu0 0.0
    %377 = vmatprep.subr.mxu0 0.0
    %378 = vmatpush1.msra.mxu0 0.0
    %379 = vmatprep.subr.mxu0 0.0
    %380 = vmatpush1.msra.mxu0 0.0
    %381 = vmatprep.subr.mxu0 0.0
    %382 = vmatpush1.msra.mxu0 0.0
    %383 = vmatprep.subr.mxu0 0.0
    %384 = vmatpush1.msra.mxu0 0.0
    %385 = vmatprep.subr.mxu0 0.0
    %386 = vmatpush1.msra.mxu0 0.0
    %387 = vmatprep.mubr.f32.mxu0 0.0
    %388 = vmatmul.mubr.f32.gmra.mrb[0].mxu0 %v321
    %v389 = vpop.f32.mrb[0].mxu0
    %v390 = vadd.f32 0.0, %v389
    %v391 = vpop.f32.mrb[0].mxu0
    %392 = vdwg.mxu0
    %v393 = vld [vmem:[#allocation4] sm:$0x3]
    %395 = vset.pattern.permute.xlu0 0
    %396 = vperm.xlu0 %395, %v208
    %v397 = vpop.permute.xlu0 %396
    %v399 = vmul.f32 %v397, %v393
    %v402 = vrot.slane %v390, 7
    %v403 = vsel %vm196, %v402, %v318
    %v405 = vadd.f32 %v399, %v403
    %vm406 = vcmask 254976
    %407 = vst.msk [vmem:[#allocation4] sm:$0x3] %vm406, %v405
    %408 = vst.msk [vmem:[#allocation2] sm:$0x3] %vm223, %v205
    // Predicated region
    $region22: #{tpu_custom_call.1} parent=1 // pred_check
      %p409 = pneg %p29
    $region23: #{tpu_custom_call.1} parent=1 // pred_check_branch
      %411 = sbr.rel (%p409) target = $region25
    $region24: #{tpu_custom_call.1} parent=1 // pred_region
      %v412 = vld [vmem:[#allocation3] sm:$0x3]
      %v413 = vrcp.pop %v412
      %v414 = vld [vmem:[#allocation4] sm:$0x3]
      %416 = vset.pattern.permute.xlu0 0
      %417 = vperm.xlu0 %416, %v413
      %v418 = vpop.permute.xlu0 %417
      %v420 = vmul.f32 %v414, %v418
      %421 = vst.msk [vmem:[#allocation8] sm:$0x3] %vm406, %v420
    $region25: #{tpu_custom_call.1} parent=1 // pred_fallthru
      _
    // Predicated region
    $region26: #{tpu_custom_call.1} parent=1 // pred_check
      _
    $region27: #{tpu_custom_call.1} parent=1 // pred_check_branch
      %423 = sbr.rel (0) target = $region29
    $region28: #{tpu_custom_call.1} parent=1 // pred_region
      %s425 = ssub.s32 32, 32
      %426 = vsyncadd [#allocation7], %s425
      %s428 = sshll.u32 [#allocation8], 4
      %s429 = int_to_ptr.vmem [resolvable:$true] %s428
      %431 = dma.vmem_to_hbm [thread:$0]  %s429, 32, %s3, [#allocation7]
    $region29: #{tpu_custom_call.1} parent=1 // pred_fallthru
      _
    // Predicated region
    $region30: #{tpu_custom_call.1} parent=1 // pred_check
      _
    $region31: #{tpu_custom_call.1} parent=1 // pred_check_branch
      %433 = sbr.rel (0) target = $region33
    $region32: #{tpu_custom_call.1} parent=1 // pred_region
      %434 = dma.done [#allocation7], 32
    $region33: #{tpu_custom_call.1} parent=1 // pred_fallthru
      _
    %435 = vsyncpa [#allocation6], 1
    %436 = vsyncpa [#allocation7], 1

</llo_original>
